<compile_context>
chip_gen: v7x
topology: tpu7x:2x2x1
jax: 0.10.0
libtpu: 0.0.40
codegen_flags: <defaults>
</compile_context>

<pallas_src>
import functools
import math

import jax
import jax.numpy as jnp
from jax.experimental import pallas as pl
from jax.experimental.pallas import tpu as pltpu


def _round_up(a: int, b: int) -> int:
    return (a + b - 1) // b * b


def _kernel_bf16(scale_ref, x_ref, w_ref, b_ref, o_ref):
    """One (tm, tn) output tile, accumulated in-place over the K grid axis.

    scale_ref : SMEM f32[1]          -> gamma * beta / q
    x_ref     : VMEM (tm, tk) bf16   pre-quantized activations (integers in [-128,127])
    w_ref     : VMEM (tk, tn) bf16   pre-ternarized, pre-transposed weights ({-1,0,1})
    b_ref     : VMEM (1, tn)  f32    bias tile
    o_ref     : VMEM (tm, tn) f32    output tile (doubles as the accumulator)
    """
    k = pl.program_id(2)
    partial = jnp.dot(x_ref[...], w_ref[...], preferred_element_type=jnp.float32)

    @pl.when(k == 0)
    def _():
        o_ref[...] = partial

    @pl.when(k > 0)
    def _():
        o_ref[...] += partial

    @pl.when(k == pl.num_programs(2) - 1)
    def _():
        o_ref[...] = o_ref[...] * scale_ref[0] + b_ref[...]


def _kernel_i8(scale_ref, x_ref, w_ref, b_ref, o_ref, acc_ref):
    """int8 x int8 -> int32 MXU path (v5e / v6e only)."""
    k = pl.program_id(2)
    partial = jnp.dot(x_ref[...], w_ref[...], preferred_element_type=jnp.int32)

    @pl.when(k == 0)
    def _():
        acc_ref[...] = partial

    @pl.when(k > 0)
    def _():
        acc_ref[...] += partial

    @pl.when(k == pl.num_programs(2) - 1)
    def _():
        o_ref[...] = acc_ref[...].astype(jnp.float32) * scale_ref[0] + b_ref[...]


def _pick_tile(full: int, align: int, cap: int) -> int:
    """Largest tile <= cap, multiple of `align`, dividing round_up(full, align)."""
    padded = _round_up(full, align)
    t = min(cap, padded)
    while padded % t != 0:
        t -= align
    return t


def bitlinear158(x, weight, bias=None, *, dim=None, bits=8, eps=1e-5,
                 use_int8=False, tm=None, tn=None, tk=None):
    """Pallas BitLinear158 forward.  x: (..., in_features) -> (..., out_features).

    use_int8=True selects the integer MXU path (bit-exact) — recommended on v5e/v6e,
    must stay False on v7x (no integer MXU mode).
    """
    if dim is not None:
        # TODO(synk): per-dim gamma (dim != None) needs a per-row activation-scale path.
        raise NotImplementedError("per-dim activation scaling (dim != None) is not supported")

    N, K = weight.shape
    orig_shape = x.shape
    x2 = x.reshape(-1, K).astype(jnp.float32)
    M = x2.shape[0]

    q = float(2 ** (bits - 1))

    # --- per-tensor scalar reductions + one-time quantization (wrapper / XLA side) ---
    w_f32 = weight.astype(jnp.float32)
    gamma = jnp.maximum(jnp.max(jnp.abs(x2)), eps)
    beta = jnp.maximum(jnp.mean(jnp.abs(w_f32)), eps)

    # Exact reference order: x * q / gamma (no precomputed reciprocal -> same rounding).
    xq_f = jnp.clip(jnp.round(x2 * q / gamma), -q, q - 1.0)
    wq_f = jnp.clip(jnp.round(w_f32 / beta), -1.0, 1.0)

    feed_dtype = jnp.int8 if use_int8 else jnp.bfloat16
    xq = xq_f.astype(feed_dtype)             # integers in [-128, 127]: exact in bf16/int8
    wqt = wq_f.T.astype(feed_dtype)          # (K, N) canonical layout for the MXU

    out_scale = (gamma * beta / q).reshape(1).astype(jnp.float32)
    bias_arr = (jnp.zeros((N,), jnp.float32) if bias is None
                else bias.astype(jnp.float32))

    # --- tile sizes: lane-dense, divisor-friendly, capped; sublane-pack aware ---
    m_align = 32 if use_int8 else 16
    if tm is None:
        tm = _pick_tile(M, m_align, 256)
    if tn is None:
        tn = _pick_tile(N, 128, 512)
    if tk is None:
        tk = _pick_tile(K, 128, 1024)

    Mp, Np, Kp = _round_up(M, tm), _round_up(N, tn), _round_up(K, tk)

    # Megacore (v7x): make sure the two parallel grid axes have >= 2 points when possible.
    if (Mp // tm) * (Np // tn) < 2 and tn >= 256 and (tn // 2) % 128 == 0:
        tn //= 2
        Np = _round_up(N, tn)

    # Padding is applied to the already-quantized arrays -> fuses with the quantize pass;
    # zero padding quantizes to 0 and contributes nothing to the matmul.
    x_p = xq if (Mp == M and Kp == K) else jnp.pad(xq, ((0, Mp - M), (0, Kp - K)))
    w_p = wqt if (Kp == K and Np == N) else jnp.pad(wqt, ((0, Kp - K), (0, Np - N)))
    b_p = (bias_arr if Np == N else jnp.pad(bias_arr, (0, Np - N))).reshape(1, Np)

    grid = (Mp // tm, Np // tn, Kp // tk)
    kernel = _kernel_i8 if use_int8 else _kernel_bf16
    scratch = [pltpu.VMEM((tm, tn), jnp.int32)] if use_int8 else []

    out = pl.pallas_call(
        kernel,
        out_shape=jax.ShapeDtypeStruct((Mp, Np), jnp.float32),
        grid_spec=pltpu.PrefetchScalarGridSpec(
            num_scalar_prefetch=0,
            grid=grid,
            in_specs=[
                pl.BlockSpec(memory_space=pltpu.MemorySpace.SMEM),     # out_scale
                pl.BlockSpec((tm, tk), lambda i, j, k: (i, k)),        # x_q
                pl.BlockSpec((tk, tn), lambda i, j, k: (k, j)),        # W_q^T
                pl.BlockSpec((1, tn), lambda i, j, k: (0, j)),         # bias
            ],
            out_specs=pl.BlockSpec((tm, tn), lambda i, j, k: (i, j)),
            scratch_shapes=scratch,
        ),
        compiler_params=pltpu.CompilerParams(
            dimension_semantics=("parallel", "parallel", "arbitrary"),
            vmem_limit_bytes=32 * 1024 * 1024,
        ),
    )(out_scale, x_p, w_p, b_p)

    out = out[:M, :N]
    return out.reshape(*orig_shape[:-1], N)


def init_bitlinear158_params(key, in_features, out_features, bias=True):
    """Matches nn.Linear / BitLinear158._reset_parameters:
    kaiming_uniform_(a=sqrt(5)) on weight => U(-1/sqrt(fan_in), 1/sqrt(fan_in));
    bias => U(-1/sqrt(fan_in), 1/sqrt(fan_in))."""
    kw, kb = jax.random.split(key)
    bound = 1.0 / math.sqrt(in_features)
    weight = jax.random.uniform(
        kw, (out_features, in_features), jnp.float32, minval=-bound, maxval=bound
    )
    if bias:
        b = jax.random.uniform(
            kb, (out_features,), jnp.float32, minval=-bound, maxval=bound
        )
    else:
        b = None
    return weight, b


def bitlinear158_reference(x, weight, bias, bits=8, eps=1e-5):
    """Pure-JAX reference mirroring the PyTorch math, for correctness checking."""
    q = float(2 ** (bits - 1))
    gamma = jnp.maximum(jnp.max(jnp.abs(x)), eps)
    beta = jnp.maximum(jnp.mean(jnp.abs(weight)), eps)
    xq = jnp.clip(jnp.round(x * q / gamma), -q, q - 1.0)
    wq = jnp.clip(jnp.round(weight / beta), -1.0, 1.0)
    out = jnp.einsum("...k,nk->...n", xq, wq) * (gamma * beta / q)
    if bias is not None:
        out = out + bias
    return out


if __name__ == "__main__":
    # NOTE: default BitLinear158(norm=None) applies no normalization before the
    # quantized linear, so the forward is exactly bitlinear158(x, W, b).
    batch, seq = 2, 8
    in_features, out_features = 128, 256

    key = jax.random.PRNGKey(0)
    k_x, k_p = jax.random.split(key)
    x = jax.random.normal(k_x, (batch, seq, in_features), jnp.float32)
    weight, bias = init_bitlinear158_params(k_p, in_features, out_features, bias=True)

    # bf16 MXU path: bit-exact container for x_q / W_q, correct on all generations
    # (use_int8=True enables the integer MXU path on v5e/v6e).
    out = bitlinear158(x, weight, bias, dim=None, bits=8, eps=1e-5)
    out = jax.block_until_ready(out)

    ref = bitlinear158_reference(x, weight, bias)
    assert out.shape == (batch, seq, out_features), out.shape
    assert jnp.allclose(out, ref, atol=1e-4, rtol=1e-4), float(
        jnp.max(jnp.abs(out - ref))
    )

    print("KERNEL_OK")
</pallas_src>

<mosaic_0001>
module attributes {stable_mosaic.version = 11 : i64} {
  func.func @_kernel_bf16(%arg0: i32, %arg1: i32, %arg2: i32, %arg3: memref<1xf32, #tpu.memory_space<smem>>, %arg4: memref<16x128xbf16, #tpu.memory_space<vmem>>, %arg5: memref<128x128xbf16, #tpu.memory_space<vmem>>, %arg6: memref<1x128xf32, #tpu.memory_space<vmem>>, %arg7: memref<16x128xf32, #tpu.memory_space<vmem>>) attributes {dimension_semantics = [#tpu.dimension_semantics<parallel>, #tpu.dimension_semantics<parallel>, #tpu.dimension_semantics<arbitrary>], iteration_bounds = array<i64: 1, 2, 1>, scalar_prefetch = 0 : i64, scratch_operands = 0 : i64, tpu.core_type = #tpu.core_type<tc>, window_params = [{transform_indices = @transform_0, window_bounds = array<i64: 1>}, {transform_indices = @transform_1, window_bounds = array<i64: 16, 128>}, {transform_indices = @transform_2, window_bounds = array<i64: 128, 128>}, {transform_indices = @transform_3, window_bounds = array<i64: 1, 128>}, {transform_indices = @transform_4, window_bounds = array<i64: 16, 128>}]} {
    %c0 = arith.constant 0 : index
    %c0_0 = arith.constant 0 : index
    %0 = vector.load %arg4[%c0, %c0_0] : memref<16x128xbf16, #tpu.memory_space<vmem>>, vector<16x128xbf16>
    %c0_1 = arith.constant 0 : index
    %c0_2 = arith.constant 0 : index
    %1 = vector.load %arg5[%c0_1, %c0_2] : memref<128x128xbf16, #tpu.memory_space<vmem>>, vector<128x128xbf16>
    %cst = arith.constant dense<0.000000e+00> : vector<16x128xf32>
    %2 = tpu.matmul %0, %1, %cst {dimension_numbers = #tpu.dot_dimension_numbers<[1], [0], [0], [1], [0, 0, 1, 1], [], []>} : vector<16x128xbf16>, vector<128x128xbf16>, vector<16x128xf32> -> vector<16x128xf32>
    %c0_i32 = arith.constant 0 : i32
    %3 = arith.cmpi eq, %arg2, %c0_i32 : i32
    %4 = arith.extui %3 : i1 to i32
    %c0_i32_3 = arith.constant 0 : i32
    %5 = arith.cmpi ne, %4, %c0_i32_3 : i32
    scf.if %5 {
      %c0_8 = arith.constant 0 : index
      %c0_9 = arith.constant 0 : index
      %12 = vector.load %arg7[%c0_8, %c0_9] : memref<16x128xf32, #tpu.memory_space<vmem>>, vector<16x128xf32>
      tpu.vector_store %arg7[%c0_8, %c0_9], %2 {strides = array<i32>} : memref<16x128xf32, #tpu.memory_space<vmem>>, vector<16x128xf32>,
    } else {
    }
    %c0_i32_4 = arith.constant 0 : i32
    %6 = arith.cmpi sgt, %arg2, %c0_i32_4 : i32
    %7 = arith.extui %6 : i1 to i32
    %c0_i32_5 = arith.constant 0 : i32
    %8 = arith.cmpi ne, %7, %c0_i32_5 : i32
    scf.if %8 {
      %c0_8 = arith.constant 0 : index
      %c0_9 = arith.constant 0 : index
      %12 = vector.load %arg7[%c0_8, %c0_9] : memref<16x128xf32, #tpu.memory_space<vmem>>, vector<16x128xf32>
      %13 = arith.addf %12, %2 : vector<16x128xf32>
      %c0_10 = arith.constant 0 : index
      %c0_11 = arith.constant 0 : index
      %14 = vector.load %arg7[%c0_10, %c0_11] : memref<16x128xf32, #tpu.memory_space<vmem>>, vector<16x128xf32>
      tpu.vector_store %arg7[%c0_10, %c0_11], %13 {strides = array<i32>} : memref<16x128xf32, #tpu.memory_space<vmem>>, vector<16x128xf32>,
    } else {
    }
    %c0_i32_6 = arith.constant 0 : i32
    %9 = arith.cmpi eq, %arg2, %c0_i32_6 : i32
    %10 = arith.extui %9 : i1 to i32
    %c0_i32_7 = arith.constant 0 : i32
    %11 = arith.cmpi ne, %10, %c0_i32_7 : i32
    scf.if %11 {
      %c0_8 = arith.constant 0 : index
      %c0_9 = arith.constant 0 : index
      %12 = vector.load %arg7[%c0_8, %c0_9] : memref<16x128xf32, #tpu.memory_space<vmem>>, vector<16x128xf32>
      %c0_10 = arith.constant 0 : index
      %13 = memref.load %arg3[%c0_10] : memref<1xf32, #tpu.memory_space<smem>>
      %14 = vector.broadcast %13 : f32 to vector<16x128xf32>
      %15 = arith.mulf %12, %14 : vector<16x128xf32>
      %c0_11 = arith.constant 0 : index
      %c0_12 = arith.constant 0 : index
      %16 = vector.load %arg6[%c0_11, %c0_12] : memref<1x128xf32, #tpu.memory_space<vmem>>, vector<1x128xf32>
      %17 = vector.broadcast %16 : vector<1x128xf32> to vector<16x128xf32>
      %18 = arith.addf %15, %17 : vector<16x128xf32>
      %c0_13 = arith.constant 0 : index
      %c0_14 = arith.constant 0 : index
      %19 = vector.load %arg7[%c0_13, %c0_14] : memref<16x128xf32, #tpu.memory_space<vmem>>, vector<16x128xf32>
      tpu.vector_store %arg7[%c0_13, %c0_14], %18 {strides = array<i32>} : memref<16x128xf32, #tpu.memory_space<vmem>>, vector<16x128xf32>,
    } else {
    }
    return
  }
  func.func @transform_0(%arg0: i32, %arg1: i32, %arg2: i32) -> i32 {
    %c0_i32 = arith.constant 0 : i32
    %c0_i32_0 = arith.constant 0 : i32
    return %c0_i32 : i32
  }
  func.func @transform_1(%arg0: i32, %arg1: i32, %arg2: i32) -> (i32, i32) {
    %c0_i32 = arith.constant 0 : i32
    return %arg0, %arg2 : i32, i32
  }
  func.func @transform_2(%arg0: i32, %arg1: i32, %arg2: i32) -> (i32, i32) {
    %c0_i32 = arith.constant 0 : i32
    return %arg2, %arg1 : i32, i32
  }
  func.func @transform_3(%arg0: i32, %arg1: i32, %arg2: i32) -> (i32, i32) {
    %c0_i32 = arith.constant 0 : i32
    %c0_i32_0 = arith.constant 0 : i32
    return %c0_i32, %arg1 : i32, i32
  }
  func.func @transform_4(%arg0: i32, %arg1: i32, %arg2: i32) -> (i32, i32) {
    %c0_i32 = arith.constant 0 : i32
    return %arg0, %arg1 : i32, i32
  }
}

</mosaic_0001>

<llo_original>
// kernel: tpu_custom_call.1
$region0: #{tpu_custom_call.1}
  #allocation0 [shape = 'u32[]', space=smem, size = 0x4, offset = 0x4, fixed_abs, tag = 'smem constant byte address 0x4 - core index']
  #allocation1 [shape = 'u32[144,128]{1,0:T(1,128)}', space=vmem, size = 0x12000, scoped, tag = 'internal scratch']
  #allocation2 [shape = 'f32[1]{0:T(128)S(6)}', space=smem, size = 0x200, scoped, tag = 'scoped memory for tpu_custom_call.1']
  %s0 = inlined_call_operand.<no memory space> [shape: f32[1], index: 0, kind: input, shape index: {}]
  %s1 = inlined_call_operand.hbm [shape: bf16[16,128], index: 1, kind: input, shape index: {}]
  %s2 = inlined_call_operand.hbm [shape: bf16[128,256], index: 2, kind: input, shape index: {}]
  %s3 = inlined_call_operand.vmem [shape: f32[1,256], index: 3, kind: input, shape index: {}]
  %s4 = inlined_call_operand.hbm [shape: f32[16,256], index: 4, kind: output, shape index: {}]
  %s5 = sld [smem:[#allocation0]]
  $region69: #{tpu_custom_call.1} parent=0
    _
  %s7 = ssub.s32 1, %s5
  %s8 = scalar_select 0, %s7, %s5
  %9 = sst [smem:[#allocation2]] %s0
  $region1: #{tpu_custom_call.1} parent=0
    #allocation3 [shape = 'u8[4096]{0}', space=vmem, size = 0x1000, scoped, tag = 'input window, operand 1, single buffered']
    #allocation4 [shape = 's32[2]{0}', space=sflag, size = 0x8, scoped, tag = 'scoped memory for tpu_custom_call.1']
    #allocation5 [shape = 's32[2]{0}', space=sflag, size = 0x8, scoped, tag = 'scoped memory for tpu_custom_call.1']
    #allocation6 [shape = 'u8[65536]{0}', space=vmem, size = 0x10000, scoped, tag = 'input window, operand 2']
    #allocation7 [shape = 's32[2]{0}', space=sflag, size = 0x8, scoped, tag = 'scoped memory for tpu_custom_call.1']
    #allocation8 [shape = 'u8[16384]{0}', space=vmem, size = 0x4000, scoped, tag = 'output window, operand 0']
    %10 = vsyncpa [#allocation4], 0
    %11 = vsyncpa [#allocation7], 0
    %s12 = scalar_lea.sflag [#allocation7], 1
    %13 = vsyncpa %s12, 0
    %14 = vsyncpa [#allocation5], 0
    %s15 = scalar_lea.sflag [#allocation5], 1
    %16 = vsyncpa %s15, 0
    loop: start=0, step=1, limit=4
    $region2: #{tpu_custom_call.1} parent=1 // loop_pre_header
      _
    $region3: #{tpu_custom_call.1} parent=1 // loop_header
      %s18 = sphi 0, %s22
      %p19 = scmp.ge.s32.totalorder %s18, 4
      %s25 = sphi 0, %s44
      %s26 = sphi 0, %s40
      %s27 = sphi 0, %s36
      %s28 = sphi 0, %s25
      %s29 = sphi 0, %s26
      %s30 = sphi 0, %s27
      %s31 = sphi 0, %s28
      %s32 = sphi 0, %s29
      %s33 = sphi 0, %s30
      %s45 = sphi 0, %s45
      %s47 = sphi 0, %s45
      %s48 = sphi 0, %s47
      %s62 = sphi 0, %s48
      %s70 = sphi 0, %s72
      %s73 = sphi 0, %s70
      %s74 = sphi 0, %s73
      %s90 = sphi 0, %s74
      %s98 = sphi 0, %s100
      %s101 = sphi 0, %s98
      %s102 = sphi 0, %s101
      %s118 = sphi 0, %s102
      %s124 = sphi 0, %s126
      %s127 = sphi 0, %s124
      %s128 = sphi 0, %s127
      %s144 = sphi 0, %s128
      %s152 = sphi 0, %s154
      %s155 = sphi 0, %s152
      %s156 = sphi 0, %s155
      %s172 = sphi 0, %s156
    $region4: #{tpu_custom_call.1} parent=1 // loop_header_branch
      %21 = sbr.rel (%p19) target = $region8
    $region5: #{tpu_custom_call.1} parent=1 // loop_body
      %s23 = ssub.s32 %s18, 1
      %s24 = ssub.s32 %s18, 2
      %s34 = sadd.s32 1, %s27
      %p35 = scmp.ge.s32.totalorder %s34, 1
      %s36 = scalar_select %p35, 0, %s34
      %s37 = sadd.s32 1, %s26
      %s38 = scalar_select %p35, %s37, %s26
      %p39 = scmp.ge.s32.totalorder %s38, 2
      %s40 = scalar_select %p39, 0, %s38
      %s41 = sadd.s32 1, %s25
      %s42 = scalar_select %p39, %s41, %s25
      %p43 = scmp.ge.s32.totalorder %s42, 1
      %s44 = scalar_select %p43, 0, %s42
      %s46 = sadd.s32 %s45, 1
      %p49 = scmp.eq.s32.totalorder %s18, 1
      %p50 = scmp.ne.s32.totalorder %s45, %s47
      %p51 = scmp.eq.s32.totalorder %s18, 0
      %p52 = por %p50, %p51
      %p53 = scmp.ne.s32.totalorder %s45, %s47
      %p54 = scmp.eq.s32.totalorder %s23, 1
      %p55 = por %p53, %p54
      %p56 = scmp.ne.s32.totalorder %s47, %s48
      %p57 = scmp.eq.s32.totalorder %s23, 0
      %p58 = por %p56, %p57
      %p59 = scmp.ne.s32.totalorder %s47, %s48
      %p60 = scmp.eq.s32.totalorder %s24, 1
      %p61 = por %p59, %p60
      %p63 = scmp.ne.s32.totalorder %s48, %s62
      %p64 = scmp.eq.s32.totalorder %s24, 0
      %p65 = por %p63, %p64
      %s66 = ssub.s32 %s25, %s44
      %s67 = ssub.s32 %s27, %s36
      %s68 = sor.u32 %s66, %s67
      %p69 = scmp.eq.s32.totalorder %s68, 0
      %s71 = sadd.s32 %s70, 1
      %s72 = scalar_select %p69, %s70, %s71
      %p75 = pneg %p69
      %p76 = scmp.eq.s32.totalorder %s18, 1
      %p77 = por %p75, %p76
      %p78 = scmp.ne.s32.totalorder %s70, %s73
      %p79 = scmp.eq.s32.totalorder %s18, 0
      %p80 = por %p78, %p79
      %p81 = scmp.ne.s32.totalorder %s70, %s73
      %p82 = scmp.eq.s32.totalorder %s23, 1
      %p83 = por %p81, %p82
      %p84 = scmp.ne.s32.totalorder %s73, %s74
      %p85 = scmp.eq.s32.totalorder %s23, 0
      %p86 = por %p84, %p85
      %p87 = scmp.ne.s32.totalorder %s73, %s74
      %p88 = scmp.eq.s32.totalorder %s24, 1
      %p89 = por %p87, %p88
      %p91 = scmp.ne.s32.totalorder %s74, %s90
      %p92 = scmp.eq.s32.totalorder %s24, 0
      %p93 = por %p91, %p92
      %s94 = ssub.s32 %s27, %s36
      %s95 = ssub.s32 %s26, %s40
      %s96 = sor.u32 %s94, %s95
      %p97 = scmp.eq.s32.totalorder %s96, 0
      %s99 = sadd.s32 %s98, 1
      %s100 = scalar_select %p97, %s98, %s99
      %p103 = pneg %p97
      %p104 = scmp.eq.s32.totalorder %s18, 1
      %p105 = por %p103, %p104
      %p106 = scmp.ne.s32.totalorder %s98, %s101
      %p107 = scmp.eq.s32.totalorder %s18, 0
      %p108 = por %p106, %p107
      %p109 = scmp.ne.s32.totalorder %s98, %s101
      %p110 = scmp.eq.s32.totalorder %s23, 1
      %p111 = por %p109, %p110
      %p112 = scmp.ne.s32.totalorder %s101, %s102
      %p113 = scmp.eq.s32.totalorder %s23, 0
      %p114 = por %p112, %p113
      %p115 = scmp.ne.s32.totalorder %s101, %s102
      %p116 = scmp.eq.s32.totalorder %s24, 1
      %p117 = por %p115, %p116
      %p119 = scmp.ne.s32.totalorder %s102, %s118
      %p120 = scmp.eq.s32.totalorder %s24, 0
      %p121 = por %p119, %p120
      %s122 = ssub.s32 %s26, %s40
      %p123 = scmp.eq.s32.totalorder %s122, 0
      %s125 = sadd.s32 %s124, 1
      %s126 = scalar_select %p123, %s124, %s125
      %p129 = pneg %p123
      %p130 = scmp.eq.s32.totalorder %s18, 1
      %p131 = por %p129, %p130
      %p132 = scmp.ne.s32.totalorder %s124, %s127
      %p133 = scmp.eq.s32.totalorder %s18, 0
      %p134 = por %p132, %p133
      %p135 = scmp.ne.s32.totalorder %s124, %s127
      %p136 = scmp.eq.s32.totalorder %s23, 1
      %p137 = por %p135, %p136
      %p138 = scmp.ne.s32.totalorder %s127, %s128
      %p139 = scmp.eq.s32.totalorder %s23, 0
      %p140 = por %p138, %p139
      %p141 = scmp.ne.s32.totalorder %s127, %s128
      %p142 = scmp.eq.s32.totalorder %s24, 1
      %p143 = por %p141, %p142
      %p145 = scmp.ne.s32.totalorder %s128, %s144
      %p146 = scmp.eq.s32.totalorder %s24, 0
      %p147 = por %p145, %p146
      %s148 = ssub.s32 %s25, %s44
      %s149 = ssub.s32 %s26, %s40
      %s150 = sor.u32 %s148, %s149
      %p151 = scmp.eq.s32.totalorder %s150, 0
      %s153 = sadd.s32 %s152, 1
      %s154 = scalar_select %p151, %s152, %s153
      %p157 = pneg %p151
      %p158 = scmp.eq.s32.totalorder %s18, 1
      %p159 = por %p157, %p158
      %p160 = scmp.ne.s32.totalorder %s152, %s155
      %p161 = scmp.eq.s32.totalorder %s18, 0
      %p162 = por %p160, %p161
      %p163 = scmp.ne.s32.totalorder %s152, %s155
      %p164 = scmp.eq.s32.totalorder %s23, 1
      %p165 = por %p163, %p164
      %p166 = scmp.ne.s32.totalorder %s155, %s156
      %p167 = scmp.eq.s32.totalorder %s23, 0
      %p168 = por %p166, %p167
      %p169 = scmp.ne.s32.totalorder %s155, %s156
      %p170 = scmp.eq.s32.totalorder %s24, 1
      %p171 = por %p169, %p170
      %p173 = scmp.ne.s32.totalorder %s156, %s172
      %p174 = scmp.eq.s32.totalorder %s24, 0
      %p175 = por %p173, %p174
      %p176 = scmp.le.s32.totalorder 1, %s18
      %p177 = scmp.lt.s32.totalorder %s18, 3
      %p178 = pnand %p176, %p177
      %p179 = pneg %p178
      // Predicated region
      $region9: #{tpu_custom_call.1} parent=5 // pred_check
        _
      $region10: #{tpu_custom_call.1} parent=5 // pred_check_branch
        %181 = sbr.rel (%p178) target = $region12
      $region11: #{tpu_custom_call.1} parent=5 // pred_region
        %s182 = ssub.s32 %s18, 1
        // Predicated region
        $region13: #{tpu_custom_call.1} parent=11 // pred_check
          %p183 = pneg %p58
        $region14: #{tpu_custom_call.1} parent=11 // pred_check_branch
          %185 = sbr.rel (%p183) target = $region16
        $region15: #{tpu_custom_call.1} parent=11 // pred_region
          _
        $region16: #{tpu_custom_call.1} parent=11 // pred_fallthru
          _
        // Predicated region
        $region17: #{tpu_custom_call.1} parent=11 // pred_check
          %p186 = pneg %p86
        $region18: #{tpu_custom_call.1} parent=11 // pred_check_branch
          %188 = sbr.rel (%p186) target = $region20
        $region19: #{tpu_custom_call.1} parent=11 // pred_region
          %s189 = smul.u32 2, %s28
          %s191 = ssub.s32 128, 128
          %192 = vsyncadd [#allocation4], %s191
          %s193 = sadd.s32 %s30, %s189
          %s194 = smul.addr %s193, 64
          %s195 = scalar_lea.hbm %s1, %s194
          %s196 = sshll.u32 [#allocation3], 4
          %s197 = int_to_ptr.vmem [resolvable:$true] %s196
          %202 = dma.hbm_to_vmem [thread:$0]  %s195, 128, %s197, [#allocation4], 64, 64, 4
        $region20: #{tpu_custom_call.1} parent=11 // pred_fallthru
          _
      $region12: #{tpu_custom_call.1} parent=5 // pred_fallthru
        _
      %p203 = scmp.lt.s32.totalorder %s18, 2
      // Predicated region
      $region21: #{tpu_custom_call.1} parent=5 // pred_check
        %p204 = pneg %p203
      $region22: #{tpu_custom_call.1} parent=5 // pred_check_branch
        %206 = sbr.rel (%p204) target = $region24
      $region23: #{tpu_custom_call.1} parent=5 // pred_region
        // Predicated region
        $region25: #{tpu_custom_call.1} parent=23 // pred_check
          %p207 = pneg %p108
        $region26: #{tpu_custom_call.1} parent=23 // pred_check_branch
          %209 = sbr.rel (%p207) target = $region28
        $region27: #{tpu_custom_call.1} parent=23 // pred_region
          %s210 = sand.u32 %s98, 1
          %s211 = scalar_lea.sflag [#allocation7], %s210
          %s212 = sand.u32 %s98, 1
          %s213 = smul.addr %s212, 64
          %s214 = scalar_lea.vmem [#allocation6], %s213
          %s215 = smul.u32 16, %s27
          %s217 = ssub.s32 1024, 1024
          %218 = vsyncadd %s211, %s217
          %s219 = smul.addr %s215, 2
          %s220 = sadd.s32 %s26, %s219
          %s221 = smul.addr %s220, 64
          %s222 = scalar_lea.hbm %s2, %s221
          %s223 = sshll.u32 %s214, 4
          %s224 = int_to_ptr.vmem [resolvable:$true] %s223
          %229 = dma.hbm_to_vmem [thread:$0]  %s222, 1024, %s224, %s211, 128, 64, 4
        $region28: #{tpu_custom_call.1} parent=23 // pred_fallthru
          _
        // Predicated region
        $region29: #{tpu_custom_call.1} parent=23 // pred_check
          %p230 = pneg %p134
        $region30: #{tpu_custom_call.1} parent=23 // pred_check_branch
          %232 = sbr.rel (%p230) target = $region32
        $region31: #{tpu_custom_call.1} parent=23 // pred_region
          %p233 = scmp.lt.s32.totalorder %s26, 1
          %s234 = scalar_select %p233, %s26, 1
          %s235 = scalar_lea.vmem %s3, %s234
        $region32: #{tpu_custom_call.1} parent=23 // pred_fallthru
          _
      $region24: #{tpu_custom_call.1} parent=5 // pred_fallthru
        _
      %p236 = scmp.le.s32.totalorder 1, %s18
      %p237 = scmp.lt.s32.totalorder %s18, 3
      %p238 = pnand %p236, %p237
      %p239 = pneg %p238
      // Predicated region
      $region33: #{tpu_custom_call.1} parent=5 // pred_check
        _
      $region34: #{tpu_custom_call.1} parent=5 // pred_check_branch
        %241 = sbr.rel (%p238) target = $region36
      $region35: #{tpu_custom_call.1} parent=5 // pred_region
        %s242 = ssub.s32 %s18, 1
        // Predicated region
        $region37: #{tpu_custom_call.1} parent=35 // pred_check
          %p243 = pneg %p86
        $region38: #{tpu_custom_call.1} parent=35 // pred_check_branch
          %245 = sbr.rel (%p243) target = $region40
        $region39: #{tpu_custom_call.1} parent=35 // pred_region
          %246 = dma.done [#allocation4], 128
        $region40: #{tpu_custom_call.1} parent=35 // pred_fallthru
          _
        %s247 = sand.u32 %s101, 1
        %s248 = scalar_lea.sflag [#allocation7], %s247
        %s249 = sand.u32 %s101, 1
        %s250 = smul.addr %s249, 64
        %s251 = scalar_lea.vmem [#allocation6], %s250
        // Predicated region
        $region41: #{tpu_custom_call.1} parent=35 // pred_check
          %p252 = pneg %p114
        $region42: #{tpu_custom_call.1} parent=35 // pred_check_branch
          %254 = sbr.rel (%p252) target = $region44
        $region43: #{tpu_custom_call.1} parent=35 // pred_region
          %255 = dma.done %s248, 1024
        $region44: #{tpu_custom_call.1} parent=35 // pred_fallthru
          _
        %p256 = pneg %p58
        %p257 = pneg %p55
        %p258 = pneg %p86
        %p259 = pneg %p83
        %s260 = sand.u32 %s101, 1
        %s261 = scalar_lea.sflag [#allocation7], %s260
        %s262 = sand.u32 %s101, 1
        %s263 = smul.addr %s262, 64
        %s264 = scalar_lea.vmem [#allocation6], %s263
        %p265 = pneg %p114
        %p266 = pneg %p111
        %p267 = scmp.lt.s32.totalorder %s29, 1
        %s268 = scalar_select %p267, %s29, 1
        %s269 = scalar_lea.vmem %s3, %s268
        %p270 = pneg %p140
        %p271 = pneg %p137
        %p272 = pneg %p168
        %p273 = pneg %p165
        %s274 = sand.u32 %s155, 1
        %s275 = scalar_lea.sflag [#allocation5], %s274
        %s276 = sand.u32 %s155, 1
        %s277 = smul.addr %s276, 16
        %s278 = scalar_lea.vmem [#allocation8], %s277
        %s279 = smul.u32 2, %s28
        %s280 = smul.u32 16, %s30
        %p281 = scmp.lt.s32.totalorder %s29, 1
        %s282 = scalar_select %p281, %s29, 1
        %s283 = scalar_lea.vmem %s3, %s282
        %s284 = smul.u32 2, %s28
        %v286 = vld [vmem:[#allocation3] sm:$0xf]
        %v287 = vld [vmem:[#allocation3 + $0x4] sm:$0xf]
        %v288 = vld [vmem:[%s251] sm:$0xf]
        %v289 = vld [vmem:[%s251 + $0x4] sm:$0xf]
        %v290 = vld [vmem:[%s251 + $0x8] sm:$0xf]
        %v291 = vld [vmem:[%s251 + $0xc] sm:$0xf]
        %v292 = vld [vmem:[%s251 + $0x10] sm:$0xf]
        %v293 = vld [vmem:[%s251 + $0x14] sm:$0xf]
        %v294 = vld [vmem:[%s251 + $0x18] sm:$0xf]
        %v295 = vld [vmem:[%s251 + $0x1c] sm:$0xf]
        %v296 = vld [vmem:[%s251 + $0x20] sm:$0xf]
        %v297 = vld [vmem:[%s251 + $0x24] sm:$0xf]
        %v298 = vld [vmem:[%s251 + $0x28] sm:$0xf]
        %v299 = vld [vmem:[%s251 + $0x2c] sm:$0xf]
        %v300 = vld [vmem:[%s251 + $0x30] sm:$0xf]
        %v301 = vld [vmem:[%s251 + $0x34] sm:$0xf]
        %v302 = vld [vmem:[%s251 + $0x38] sm:$0xf]
        %v303 = vld [vmem:[%s251 + $0x3c] sm:$0xf]
        %v306 = vunpack.c.l.b16 %v286
        %v307 = vunpack.c.l.b16 %v287
        %v308 = vpack.c.b16 %v307, %v306
        %v326 = vunpack.c.l.b16 %v288
        %v327 = vunpack.c.l.b16 %v289
        %v328 = vunpack.c.l.b16 %v290
        %v329 = vunpack.c.l.b16 %v291
        %v330 = vunpack.c.l.b16 %v292
        %v331 = vunpack.c.l.b16 %v293
        %v332 = vunpack.c.l.b16 %v294
        %v333 = vunpack.c.l.b16 %v295
        %v334 = vunpack.c.l.b16 %v296
        %v335 = vunpack.c.l.b16 %v297
        %v336 = vunpack.c.l.b16 %v298
        %v337 = vunpack.c.l.b16 %v299
        %v338 = vunpack.c.l.b16 %v300
        %v339 = vunpack.c.l.b16 %v301
        %v340 = vunpack.c.l.b16 %v302
        %v341 = vunpack.c.l.b16 %v303
        %v342 = vpack.c.b16 %v327, %v326
        %v343 = vpack.c.b16 %v329, %v328
        %v344 = vpack.c.b16 %v331, %v330
        %v345 = vpack.c.b16 %v333, %v332
        %v346 = vpack.c.b16 %v335, %v334
        %v347 = vpack.c.b16 %v337, %v336
        %v348 = vpack.c.b16 %v339, %v338
        %v349 = vpack.c.b16 %v341, %v340
        %358 = vmatprep.subr.bf16.mxu0 0
        %359 = vmatpush1.bf16.msra.mxu0 %v342
        %360 = vmatprep.subr.bf16.mxu0 0
        %361 = vmatpush1.bf16.msra.mxu0 %v343
        %362 = vmatprep.subr.bf16.mxu0 0
        %363 = vmatpush1.bf16.msra.mxu0 %v344
        %364 = vmatprep.subr.bf16.mxu0 0
        %365 = vmatpush1.bf16.msra.mxu0 %v345
        %366 = vmatprep.subr.bf16.mxu0 0
        %367 = vmatpush1.bf16.msra.mxu0 %v346
        %368 = vmatprep.subr.bf16.mxu0 0
        %369 = vmatpush1.bf16.msra.mxu0 %v347
        %370 = vmatprep.subr.bf16.mxu0 0
        %371 = vmatpush1.bf16.msra.mxu0 %v348
        %372 = vmatprep.subr.bf16.mxu0 0
        %373 = vmatpush1.bf16.msra.mxu0 %v349
        %374 = vmatprep.subr.bf16.mxu0 0
        %375 = vmatpush1.bf16.msra.mxu0 0
        %376 = vmatprep.subr.bf16.mxu0 0
        %377 = vmatpush1.bf16.msra.mxu0 0
        %378 = vmatprep.subr.bf16.mxu0 0
        %379 = vmatpush1.bf16.msra.mxu0 0
        %380 = vmatprep.subr.bf16.mxu0 0
        %381 = vmatpush1.bf16.msra.mxu0 0
        %382 = vmatprep.subr.bf16.mxu0 0
        %383 = vmatpush1.bf16.msra.mxu0 0
        %384 = vmatprep.subr.bf16.mxu0 0
        %385 = vmatpush1.bf16.msra.mxu0 0
        %386 = vmatprep.subr.bf16.mxu0 0
        %387 = vmatpush1.bf16.msra.mxu0 0
        %388 = vmatprep.subr.bf16.mxu0 0
        %389 = vmatpush1.bf16.msra.mxu0 0
        %390 = vmatprep.mubr.bf16.mxu0 0
        %391 = vmatmul.mubr.bf16.gmra.mrb[0].mxu0 %v308
        %v392 = vpop.f32.mrb[0].mxu0
        %v393 = vadd.f32 0.0, %v392
        %v394 = vpop.f32.mrb[0].mxu0
        %v395 = vpop.f32.mrb[0].mxu0
        %v396 = vadd.f32 0.0, %v395
        %v397 = vpop.f32.mrb[0].mxu0
        %398 = vdwg.mxu0
        %p399 = scmp.eq.s32.totalorder %s30, 0
        // Predicated region
        $region45: #{tpu_custom_call.1} parent=35 // pred_check
          %p400 = pneg %p399
        $region46: #{tpu_custom_call.1} parent=35 // pred_check_branch
          %402 = sbr.rel (%p400) target = $region48
        $region47: #{tpu_custom_call.1} parent=35 // pred_region
          %403 = vst [vmem:[%s278] sm:$0xff] %v393
          %404 = vst [vmem:[%s278 + $0x8] sm:$0xff] %v396
        $region48: #{tpu_custom_call.1} parent=35 // pred_fallthru
          _
        %p405 = scmp.gt.s32.totalorder %s30, 0
        // Predicated region
        $region49: #{tpu_custom_call.1} parent=35 // pred_check
          %p406 = pneg %p405
        $region50: #{tpu_custom_call.1} parent=35 // pred_check_branch
          %408 = sbr.rel (%p406) target = $region52
        $region51: #{tpu_custom_call.1} parent=35 // pred_region
          %v409 = vld [vmem:[%s278] sm:$0xff]
          %v410 = vld [vmem:[%s278 + $0x8] sm:$0xff]
          %v411 = vadd.f32 %v409, %v393
          %v412 = vadd.f32 %v410, %v396
          %413 = vst [vmem:[%s278] sm:$0xff] %v411
          %414 = vst [vmem:[%s278 + $0x8] sm:$0xff] %v412
        $region52: #{tpu_custom_call.1} parent=35 // pred_fallthru
          _
        // Predicated region
        $region53: #{tpu_custom_call.1} parent=35 // pred_check
          %p415 = pneg %p399
        $region54: #{tpu_custom_call.1} parent=35 // pred_check_branch
          %417 = sbr.rel (%p415) target = $region56
        $region55: #{tpu_custom_call.1} parent=35 // pred_region
          %v418 = vld [vmem:[%s278] sm:$0xff]
          %v419 = vld [vmem:[%s278 + $0x8] sm:$0xff]
          %s420 = sld [smem:[#allocation2]]
          %v421 = vstv %s420
          %v422 = vmul.f32 %v418, %v421
          %v423 = vmul.f32 %v419, %v421
          %v424 = vld [vmem:[%s283] sm:$0x1]
          %v426 = vlaneseq
          %v427 = vshrl.u32 %v426, 7
          %v428 = vsub.s32 0, %v427
          %v429 = vrot.slane %v424, %v428
          %v431 = vadd.f32 %v422, %v429
          %v432 = vadd.f32 %v423, %v429
          %433 = vst [vmem:[%s278] sm:$0xff] %v431
          %434 = vst [vmem:[%s278 + $0x8] sm:$0xff] %v432
        $region56: #{tpu_custom_call.1} parent=35 // pred_fallthru
          _
        %s435 = sand.u32 %s155, 1
        %s436 = scalar_lea.sflag [#allocation5], %s435
        %s437 = sand.u32 %s155, 1
        %s438 = smul.addr %s437, 16
        %s439 = scalar_lea.vmem [#allocation8], %s438
        // Predicated region
        $region57: #{tpu_custom_call.1} parent=35 // pred_check
          %p440 = pneg %p165
        $region58: #{tpu_custom_call.1} parent=35 // pred_check_branch
          %442 = sbr.rel (%p440) target = $region60
        $region59: #{tpu_custom_call.1} parent=35 // pred_region
          %s443 = smul.u32 2, %s28
          %s445 = ssub.s32 256, 256
          %446 = vsyncadd %s436, %s445
          %s447 = smul.addr %s443, 2
          %s448 = sadd.s32 %s29, %s447
          %s449 = smul.addr %s448, 128
          %s450 = scalar_lea.hbm %s4, %s449
          %s451 = sshll.u32 %s439, 4
          %s452 = int_to_ptr.vmem [resolvable:$true] %s451
          %457 = dma.vmem_to_hbm [thread:$0]  %s452, 256, %s450, %s436, 128, 256, 8
        $region60: #{tpu_custom_call.1} parent=35 // pred_fallthru
          _
      $region36: #{tpu_custom_call.1} parent=5 // pred_fallthru
        _
      %p458 = scmp.le.s32.totalorder 2, %s18
      // Predicated region
      $region61: #{tpu_custom_call.1} parent=5 // pred_check
        %p459 = pneg %p458
      $region62: #{tpu_custom_call.1} parent=5 // pred_check_branch
        %461 = sbr.rel (%p459) target = $region64
      $region63: #{tpu_custom_call.1} parent=5 // pred_region
        %s462 = ssub.s32 %s18, 2
        // Predicated region
        $region65: #{tpu_custom_call.1} parent=63 // pred_check
          %p463 = pneg %p171
        $region66: #{tpu_custom_call.1} parent=63 // pred_check_branch
          %465 = sbr.rel (%p463) target = $region68
        $region67: #{tpu_custom_call.1} parent=63 // pred_region
          %s466 = sand.u32 %s156, 1
          %s467 = scalar_lea.sflag [#allocation5], %s466
          %s468 = sand.u32 %s156, 1
          %s469 = smul.addr %s468, 16
          %s470 = scalar_lea.vmem [#allocation8], %s469
          %471 = dma.done %s467, 256
        $region68: #{tpu_custom_call.1} parent=63 // pred_fallthru
          _
      $region64: #{tpu_custom_call.1} parent=5 // pred_fallthru
        _
    $region6: #{tpu_custom_call.1} parent=1 // loop_footer
      %s22 = sadd.s32 1, %s18
    $region7: #{tpu_custom_call.1} parent=1 // loop_footer_branch
      %17 = sbr.rel target = $region3
    $region8: #{tpu_custom_call.1} parent=1 // loop_exit
      _
    %472 = vsyncpa [#allocation4], 1
    %s473 = scalar_lea.sflag [#allocation4], 1
    %474 = vsyncpa %s473, 1
    %475 = vsyncpa [#allocation7], 1
    %s476 = scalar_lea.sflag [#allocation7], 1
    %477 = vsyncpa %s476, 1
    %478 = vsyncpa [#allocation5], 1
    %s479 = scalar_lea.sflag [#allocation5], 1
    %480 = vsyncpa %s479, 1

</llo_original>
